<compile_context>
chip_gen: v7x
topology: tpu7x:2x2x1
jax: 0.10.0
libtpu: 0.0.40
codegen_flags: <defaults>
</compile_context>

<pallas_src>
import functools
import math

import jax
import jax.numpy as jnp
from jax.experimental import pallas as pl
from jax.experimental.pallas import tpu as pltpu


def _alpha_kernel(x_ref, w_ref, o_ref, acc_ref, *, inv_hw, tile_hw, row_len,
                  n_inner, needs_mask):
    """Grid = (num_parts, n_inner).

    x_ref  : (rows, tile_hw) native dtype   -- one lane-tile of the HW stream
    w_ref  : (E, rows)                       -- fc weight, columns repeated k times
    o_ref  : (1, E, 1) f32                   -- partial logits for this part
    acc_ref: (rows, 1) f32 VMEM scratch      -- running per-row sum
    """
    p = pl.program_id(0)          # which half of the HW stream ("parallel")
    i = pl.program_id(1)          # position within this half ("arbitrary")

    @pl.when(i == 0)
    def _init():
        acc_ref[...] = jnp.zeros_like(acc_ref)

    def _accumulate(tile):
        # VPU fold: lane-tile adds + one tiny cross-lane reduce, exact f32 acc.
        acc_ref[...] += jnp.sum(tile.astype(jnp.float32), axis=1, keepdims=True)

    if needs_mask:
        blk = p * n_inner + i                      # virtual block index
        is_full = (blk + 1) * tile_hw <= row_len   # fully in-bounds tile?

        @pl.when(is_full)
        def _full_tile():
            _accumulate(x_ref[...])

        @pl.when(jnp.logical_not(is_full))
        def _ragged_tile():
            # Ragged last tile (or clamped duplicate past the end): zero the
            # out-of-range lanes before accumulating.
            lane = jax.lax.broadcasted_iota(jnp.int32, x_ref.shape, 1)
            valid = (blk * tile_hw + lane) < row_len
            _accumulate(jnp.where(valid, x_ref[...], jnp.array(0, x_ref.dtype)))
    else:
        _accumulate(x_ref[...])

    @pl.when(i == n_inner - 1)
    def _finalize():
        pooled = acc_ref[...] * inv_hw                               # (rows, 1)
        logits = jnp.dot(w_ref[...].astype(jnp.float32), pooled,
                         preferred_element_type=jnp.float32)         # (E, 1)
        o_ref[0] = logits


def _round_up(x, m):
    return ((x + m - 1) // m) * m


def _vmem_capacity_bytes():
    try:
        return int(pltpu.get_tpu_info().vmem_capacity_bytes)
    except Exception:
        return 64 * 1024 * 1024          # conservative (v7x-sized) fallback


def alpha_forward(x, w, b, *, max_buffer_bytes=None):
    """x: (N, C, H, W) with N*C == in_channels of the Linear.
       w: (num_experts, in_channels)  -- native PyTorch Linear weight layout.
       b: (num_experts,)
    Returns (num_experts,) float32, matching torch Alpha.forward."""
    n, c, h, wd = x.shape
    in_channels = n * c
    num_experts, w_in = w.shape
    assert w_in == in_channels, "flattened pooled size must equal in_channels"

    hw = h * wd
    itemsize = jnp.dtype(x.dtype).itemsize

    # ---- sublane densification: split each channel's HW stream into k contiguous
    # sub-rows (pure reshape, no copy) so rows = C*k fills the sublane axis.
    pack = 8 * max(1, 4 // itemsize)             # rows per vreg: 8 f32, 16 bf16, 32 i8
    candidates = (pack // math.gcd(in_channels, pack),
                  8 // math.gcd(in_channels, 8), 1)
    k = next(kk for kk in candidates if hw % kk == 0)
    rows = in_channels * k
    row_len = hw // k

    x2d = x.reshape(rows, row_len)                        # free, contiguous reshape
    w_k = jnp.repeat(w, k, axis=1) if k > 1 else w        # (E, rows), tiny

    # ---- tile sizing by byte budget (generation-gated on VMEM capacity).
    vmem_cap = _vmem_capacity_bytes()
    if vmem_cap >= 96 * 1024 * 1024:          # v5e / v6e: 128 MiB physical VMEM
        buf_budget = 16 * 1024 * 1024
        vmem_limit_cap = 56 * 1024 * 1024
    else:                                     # v7x: 64 MiB physical VMEM
        buf_budget = 10 * 1024 * 1024
        vmem_limit_cap = 36 * 1024 * 1024
    if max_buffer_bytes is not None:          # test hook / manual override
        buf_budget = int(max_buffer_bytes)

    lane = 128
    padded_rows = _round_up(rows, pack)       # VMEM sublane padding of the block
    max_lanes = max(lane, (buf_budget // (padded_rows * itemsize)) // lane * lane)
    if row_len <= max_lanes:
        tile_hw, n_blocks = row_len, 1        # single full block (no 128 constraint)
    else:
        tile_hw = max_lanes                   # multiple of 128 lanes
        n_blocks = pl.cdiv(row_len, tile_hw)

    # Split the HW stream into two halves: ~2x streaming on v7x's two TensorCores
    # (harmless sequential pass on single-core v5e/v6e).
    num_parts = 2 if n_blocks >= 2 else 1
    n_inner = pl.cdiv(n_blocks, num_parts)
    needs_mask = (row_len % tile_hw != 0) or (num_parts * n_inner != n_blocks)

    if num_parts * n_inner == n_blocks:
        x_index = lambda p, i: (0, p * n_inner + i)
    else:  # clamp virtual block ids past the end; their lanes are fully masked
        x_index = lambda p, i: (0, jnp.minimum(p * n_inner + i, n_blocks - 1))

    x_buf_bytes = padded_rows * tile_hw * itemsize        # one double-buffer slot
    vmem_limit = int(min(vmem_limit_cap,
                         max(16 * 1024 * 1024, 2 * x_buf_bytes + 8 * 1024 * 1024)))

    grid_spec = pltpu.PrefetchScalarGridSpec(
        num_scalar_prefetch=0,
        grid=(num_parts, n_inner),
        in_specs=[
            pl.BlockSpec((rows, tile_hw), x_index),
            pl.BlockSpec((num_experts, rows), lambda p, i: (0, 0)),
        ],
        out_specs=pl.BlockSpec((1, num_experts, 1), lambda p, i: (p, 0, 0)),
        scratch_shapes=[pltpu.VMEM((rows, 1), jnp.float32)],
    )

    kernel = functools.partial(
        _alpha_kernel, inv_hw=1.0 / float(hw), tile_hw=tile_hw, row_len=row_len,
        n_inner=n_inner, needs_mask=needs_mask)

    partials = pl.pallas_call(
        kernel,
        out_shape=jax.ShapeDtypeStruct((num_parts, num_experts, 1), jnp.float32),
        grid_spec=grid_spec,
        compiler_params=pltpu.CompilerParams(
            dimension_semantics=("parallel", "arbitrary"),
            vmem_limit_bytes=vmem_limit,
        ),
        cost_estimate=pl.CostEstimate(
            flops=in_channels * hw + 2 * num_parts * num_experts * rows,
            transcendentals=0,
            bytes_accessed=(in_channels * hw * itemsize
                            + num_experts * rows * jnp.dtype(w.dtype).itemsize
                            + num_parts * num_experts * 4),
        ),
    )(x2d, w_k)

    # Tiny epilogue (<= 2*E floats): combine per-part partial logits + bias.
    return partials.reshape(num_parts, num_experts).sum(axis=0) + b.astype(jnp.float32)


def _alpha_reference(x, w, b):
    """Pure-JAX reference with the same semantics as the torch forward."""
    pooled = jnp.mean(x.astype(jnp.float32), axis=(2, 3)).reshape(-1)   # (N*C,)
    return pooled @ w.astype(jnp.float32).T + b.astype(jnp.float32)


if __name__ == "__main__":
    key = jax.random.PRNGKey(0)
    keys = jax.random.split(key, 9)
    ATOL, RTOL = 5e-4, 5e-3

    def _check(x, w, b, **kw):
        out = alpha_forward(x, w, b, **kw)
        jax.block_until_ready(out)
        ref = _alpha_reference(x, w, b)
        assert out.shape == ref.shape, (out.shape, ref.shape)
        assert jnp.allclose(out, ref, atol=ATOL, rtol=RTOL), (out, ref)
        return out

    # 1) Canonical small config: batch=1 (torch.flatten => N*C == in_channels),
    #    in_channels=4, 16x16 spatial, 8 experts.  f32, single block, k=2.
    N, C, H, W, E = 1, 4, 16, 16, 8
    in_ch = N * C
    bound = 1.0 / math.sqrt(in_ch)
    x = jax.random.normal(keys[0], (N, C, H, W), dtype=jnp.float32)
    fw = jax.random.uniform(keys[1], (E, in_ch), minval=-bound, maxval=bound,
                            dtype=jnp.float32)
    fb = jax.random.uniform(keys[2], (E,), minval=-bound, maxval=bound,
                            dtype=jnp.float32)
    _check(x, fw, fb)

    # 2) bf16 input: streamed in native dtype, f32 accumulation, k=4 row split.
    _check(x.astype(jnp.bfloat16), fw, fb)

    # 3) Tiled path: C=8, 57x57 (hw=3249) with a forced 16 KiB buffer budget ->
    #    7 blocks of 512 lanes split over 2 parts (exercises init/accumulate/
    #    finalize, the ragged-tile mask and the clamped virtual block).
    N3, C3, H3, W3, E3 = 1, 8, 57, 57, 8
    in3 = N3 * C3
    b3 = 1.0 / math.sqrt(in3)
    x3 = jax.random.normal(keys[3], (N3, C3, H3, W3), dtype=jnp.float32)
    w3 = jax.random.uniform(keys[4], (E3, in3), minval=-b3, maxval=b3,
                            dtype=jnp.float32)
    bb3 = jax.random.uniform(keys[5], (E3,), minval=-b3, maxval=b3,
                             dtype=jnp.float32)
    _check(x3, w3, bb3, max_buffer_bytes=8 * 512 * 4)

    # 4) Non-power-of-two channels (C=6 -> k=4, rows=24), 16 experts, 32x32.
    N4, C4, H4, W4, E4 = 1, 6, 32, 32, 16
    in4 = N4 * C4
    b4 = 1.0 / math.sqrt(in4)
    x4 = jax.random.normal(keys[6], (N4, C4, H4, W4), dtype=jnp.float32)
    w4 = jax.random.uniform(keys[7], (E4, in4), minval=-b4, maxval=b4,
                            dtype=jnp.float32)
    bb4 = jax.random.uniform(keys[8], (E4,), minval=-b4, maxval=b4,
                             dtype=jnp.float32)
    _check(x4, w4, bb4)

    print("KERNEL_OK")
</pallas_src>

<mosaic_0001>
module attributes {stable_mosaic.version = 11 : i64} {
  func.func @_alpha_kernel(%arg0: i32, %arg1: i32, %arg2: memref<8x128xf32, #tpu.memory_space<vmem>>, %arg3: memref<8x8xf32, #tpu.memory_space<vmem>>, %arg4: memref<1x8x1xf32, #tpu.memory_space<vmem>>, %arg5: memref<8x1xf32, #tpu.memory_space<vmem>>) attributes {dimension_semantics = [#tpu.dimension_semantics<parallel>, #tpu.dimension_semantics<arbitrary>], iteration_bounds = array<i64: 1, 1>, scalar_prefetch = 0 : i64, scratch_operands = 1 : i64, tpu.core_type = #tpu.core_type<tc>, window_params = [{transform_indices = @transform_0, window_bounds = array<i64: 8, 128>}, {pipeline_mode = #tpu.pipeline_mode<synchronous>, transform_indices = @transform_1, window_bounds = array<i64: 8, 8>}, {transform_indices = @transform_2, window_bounds = array<i64: 1, 8, 1>}]} {
    %c0_i32 = arith.constant 0 : i32
    %0 = arith.cmpi eq, %arg1, %c0_i32 : i32
    %1 = arith.extui %0 : i1 to i32
    %c0_i32_0 = arith.constant 0 : i32
    %2 = arith.cmpi ne, %1, %c0_i32_0 : i32
    scf.if %2 {
      %cst_8 = arith.constant 0.000000e+00 : f32
      %12 = vector.broadcast %cst_8 : f32 to vector<8x1xf32>
      %c0_9 = arith.constant 0 : index
      %c0_10 = arith.constant 0 : index
      %13 = vector.load %arg5[%c0_9, %c0_10] : memref<8x1xf32, #tpu.memory_space<vmem>>, vector<8x1xf32>
      tpu.vector_store %arg5[%c0_9, %c0_10], %12 {strides = array<i32>} : memref<8x1xf32, #tpu.memory_space<vmem>>, vector<8x1xf32>,
    } else {
    }
    %c0 = arith.constant 0 : index
    %c0_1 = arith.constant 0 : index
    %3 = vector.load %arg2[%c0, %c0_1] : memref<8x128xf32, #tpu.memory_space<vmem>>, vector<8x128xf32>
    %c0_2 = arith.constant 0 : index
    %c0_3 = arith.constant 0 : index
    %4 = vector.load %arg5[%c0_2, %c0_3] : memref<8x1xf32, #tpu.memory_space<vmem>>, vector<8x1xf32>
    %cst = arith.constant dense<0.000000e+00> : vector<8xf32>
    %5 = vector.multi_reduction <add>, %3, %cst [1] : vector<8x128xf32> to vector<8xf32>
    %6 = vector.shape_cast %5 : vector<8xf32> to vector<8x1xf32>
    %7 = arith.addf %4, %6 : vector<8x1xf32>
    %c0_4 = arith.constant 0 : index
    %c0_5 = arith.constant 0 : index
    %8 = vector.load %arg5[%c0_4, %c0_5] : memref<8x1xf32, #tpu.memory_space<vmem>>, vector<8x1xf32>
    tpu.vector_store %arg5[%c0_4, %c0_5], %7 {strides = array<i32>} : memref<8x1xf32, #tpu.memory_space<vmem>>, vector<8x1xf32>,
    %c0_i32_6 = arith.constant 0 : i32
    %9 = arith.cmpi eq, %arg1, %c0_i32_6 : i32
    %10 = arith.extui %9 : i1 to i32
    %c0_i32_7 = arith.constant 0 : i32
    %11 = arith.cmpi ne, %10, %c0_i32_7 : i32
    scf.if %11 {
      %c0_8 = arith.constant 0 : index
      %c0_9 = arith.constant 0 : index
      %12 = vector.load %arg5[%c0_8, %c0_9] : memref<8x1xf32, #tpu.memory_space<vmem>>, vector<8x1xf32>
      %cst_10 = arith.constant 3.906250e-03 : f32
      %13 = vector.broadcast %cst_10 : f32 to vector<8x1xf32>
      %14 = arith.mulf %12, %13 : vector<8x1xf32>
      %c0_11 = arith.constant 0 : index
      %c0_12 = arith.constant 0 : index
      %15 = vector.load %arg3[%c0_11, %c0_12] : memref<8x8xf32, #tpu.memory_space<vmem>>, vector<8x8xf32>
      %cst_13 = arith.constant dense<0.000000e+00> : vector<8x1xf32>
      %16 = tpu.matmul %15, %14, %cst_13 {dimension_numbers = #tpu.dot_dimension_numbers<[1], [0], [0], [1], [0, 0, 1, 1], [], []>} : vector<8x8xf32>, vector<8x1xf32>, vector<8x1xf32> -> vector<8x1xf32>
      %c0_14 = arith.constant 0 : index
      %c0_15 = arith.constant 0 : index
      %c0_16 = arith.constant 0 : index
      %17 = vector.load %arg4[%c0_14, %c0_15, %c0_16] : memref<1x8x1xf32, #tpu.memory_space<vmem>>, vector<1x8x1xf32>
      %18 = vector.shape_cast %17 : vector<1x8x1xf32> to vector<8x1xf32>
      %19 = vector.shape_cast %16 : vector<8x1xf32> to vector<1x8x1xf32>
      tpu.vector_store %arg4[%c0_14, %c0_15, %c0_16], %19 {strides = array<i32>} : memref<1x8x1xf32, #tpu.memory_space<vmem>>, vector<1x8x1xf32>,
    } else {
    }
    return
  }
  func.func @transform_0(%arg0: i32, %arg1: i32) -> (i32, i32) {
    %c1_i32 = arith.constant 1 : i32
    %0 = arith.muli %arg0, %c1_i32 : i32
    %1 = arith.addi %0, %arg1 : i32
    %c0_i32 = arith.constant 0 : i32
    %c0_i32_0 = arith.constant 0 : i32
    return %c0_i32, %1 : i32, i32
  }
  func.func @transform_1(%arg0: i32, %arg1: i32) -> (i32, i32) {
    %c0_i32 = arith.constant 0 : i32
    %c0_i32_0 = arith.constant 0 : i32
    %c0_i32_1 = arith.constant 0 : i32
    return %c0_i32, %c0_i32_0 : i32, i32
  }
  func.func @transform_2(%arg0: i32, %arg1: i32) -> (i32, i32, i32) {
    %c0_i32 = arith.constant 0 : i32
    %c0_i32_0 = arith.constant 0 : i32
    %c0_i32_1 = arith.constant 0 : i32
    return %arg0, %c0_i32, %c0_i32_0 : i32, i32, i32
  }
}

</mosaic_0001>

<llo_original>
// kernel: tpu_custom_call.1
$region0: #{tpu_custom_call.1}
  #allocation0 [shape = 'u32[]', space=smem, size = 0x4, offset = 0x4, fixed_abs, tag = 'smem constant byte address 0x4 - core index']
  #allocation1 [shape = 'u32[144,128]{1,0:T(1,128)}', space=vmem, size = 0x12000, scoped, tag = 'internal scratch']
  #allocation2 [shape = 'f32[8,1]{1,0:T(8,128)}', space=vmem, size = 0x1000, scoped, tag = 'scratch operand']
  %s0 = inlined_call_operand.hbm [shape: f32[8,128], index: 0, kind: input, shape index: {}]
  %s1 = inlined_call_operand.hbm [shape: f32[8,8], index: 1, kind: input, shape index: {}]
  %s2 = inlined_call_operand.vmem [shape: f32[1,8,1], index: 2, kind: output, shape index: {}]
  %s3 = sld [smem:[#allocation0]]
  $region34: #{tpu_custom_call.1} parent=0
    _
  %s5 = ssub.s32 1, %s3
  %s6 = scalar_select 0, %s5, %s3
  $region1: #{tpu_custom_call.1} parent=0
    #allocation3 [shape = 'u8[4096]{0}', space=vmem, size = 0x1000, scoped, tag = 'input window, operand 0, single buffered']
    #allocation4 [shape = 's32[1]{0}', space=sflag, size = 0x4, scoped, tag = 'scoped memory for tpu_custom_call.1']
    #allocation5 [shape = 'u8[4096]{0}', space=vmem, size = 0x1000, scoped, tag = 'input window, operand 1, single buffered']
    #allocation6 [shape = 's32[1]{0}', space=sflag, size = 0x4, scoped, tag = 'scoped memory for tpu_custom_call.1']
    %7 = vsyncpa [#allocation4], 0
    %8 = vsyncpa [#allocation6], 0
    // Predicated region
    $region2: #{tpu_custom_call.1} parent=1 // pred_check
      _
    $region3: #{tpu_custom_call.1} parent=1 // pred_check_branch
      %10 = sbr.rel (0) target = $region5
    $region4: #{tpu_custom_call.1} parent=1 // pred_region
      %s11 = sadd.s32 0, 0
      %s13 = ssub.s32 128, 128
      %14 = vsyncadd [#allocation4], %s13
      %s15 = smul.addr %s11, 128
      %s16 = scalar_lea.hbm %s0, %s15
      %s18 = sshll.u32 [#allocation3], 4
      %s19 = int_to_ptr.vmem [resolvable:$true] %s18
      %21 = dma.hbm_to_vmem [thread:$0]  %s16, 128, %s19, [#allocation4]
    $region5: #{tpu_custom_call.1} parent=1 // pred_fallthru
      _
    // Predicated region
    $region6: #{tpu_custom_call.1} parent=1 // pred_check
      _
    $region7: #{tpu_custom_call.1} parent=1 // pred_check_branch
      %23 = sbr.rel (0) target = $region9
    $region8: #{tpu_custom_call.1} parent=1 // pred_region
      %s25 = ssub.s32 128, 128
      %26 = vsyncadd [#allocation6], %s25
      %s28 = sshll.u32 [#allocation5], 4
      %s29 = int_to_ptr.vmem [resolvable:$true] %s28
      %31 = dma.hbm_to_vmem [thread:$0]  %s1, 128, %s29, [#allocation6]
    $region9: #{tpu_custom_call.1} parent=1 // pred_fallthru
      _
    // Predicated region
    $region10: #{tpu_custom_call.1} parent=1 // pred_check
      _
    $region11: #{tpu_custom_call.1} parent=1 // pred_check_branch
      %33 = sbr.rel (0) target = $region13
    $region12: #{tpu_custom_call.1} parent=1 // pred_region
      %34 = dma.done [#allocation4], 128
    $region13: #{tpu_custom_call.1} parent=1 // pred_fallthru
      _
    // Predicated region
    $region14: #{tpu_custom_call.1} parent=1 // pred_check
      _
    $region15: #{tpu_custom_call.1} parent=1 // pred_check_branch
      %36 = sbr.rel (0) target = $region17
    $region16: #{tpu_custom_call.1} parent=1 // pred_region
      %37 = dma.done [#allocation6], 128
    $region17: #{tpu_custom_call.1} parent=1 // pred_fallthru
      _
    %s38 = sadd.s32 0, 0
    %p39 = scmp.eq.s32.totalorder 0, 0
    // Predicated region
    $region18: #{tpu_custom_call.1} parent=1 // pred_check
      %p40 = pneg %p39
    $region19: #{tpu_custom_call.1} parent=1 // pred_check_branch
      %42 = sbr.rel (%p40) target = $region21
    $region20: #{tpu_custom_call.1} parent=1 // pred_region
      %vm43 = vcmask 7168
      %44 = vst.msk [vmem:[#allocation2] sm:$0xff] %vm43, 0.0
    $region21: #{tpu_custom_call.1} parent=1 // pred_fallthru
      _
    %v45 = vld [vmem:[#allocation3] sm:$0xff]
    %v46 = vld [vmem:[#allocation2] sm:$0xff]
    %47 = vadd.xlane.f32.xlu0 %v45
    %v48 = vpop.xlane.xlu0 %47
    %v49 = vadd.f32 %v46, %v48
    %vm50 = vcmask 7168
    %51 = vst.msk [vmem:[#allocation2] sm:$0xff] %vm50, %v49
    // Predicated region
    $region22: #{tpu_custom_call.1} parent=1 // pred_check
      %p52 = pneg %p39
    $region23: #{tpu_custom_call.1} parent=1 // pred_check_branch
      %54 = sbr.rel (%p52) target = $region25
    $region24: #{tpu_custom_call.1} parent=1 // pred_region
      %v55 = vld [vmem:[#allocation2] sm:$0xff]
      %v56 = vmul.f32 %v55, 0.00390625
      %v57 = vld [vmem:[#allocation5] sm:$0xff]
      %vm58 = vcmask 64512
      %v60 = vsel %vm58, %v57, 0
      %62 = vmatprep.subr.mxu0 0.0
      %63 = vmatpush1.msra.mxu0 %v56
      %64 = vmatprep.subr.mxu0 0.0
      %65 = vmatpush1.msra.mxu0 0.0
      %66 = vmatprep.subr.mxu0 0.0
      %67 = vmatpush1.msra.mxu0 0.0
      %68 = vmatprep.subr.mxu0 0.0
      %69 = vmatpush1.msra.mxu0 0.0
      %70 = vmatprep.subr.mxu0 0.0
      %71 = vmatpush1.msra.mxu0 0.0
      %72 = vmatprep.subr.mxu0 0.0
      %73 = vmatpush1.msra.mxu0 0.0
      %74 = vmatprep.subr.mxu0 0.0
      %75 = vmatpush1.msra.mxu0 0.0
      %76 = vmatprep.subr.mxu0 0.0
      %77 = vmatpush1.msra.mxu0 0.0
      %78 = vmatprep.subr.mxu0 0.0
      %79 = vmatpush1.msra.mxu0 0.0
      %80 = vmatprep.subr.mxu0 0.0
      %81 = vmatpush1.msra.mxu0 0.0
      %82 = vmatprep.subr.mxu0 0.0
      %83 = vmatpush1.msra.mxu0 0.0
      %84 = vmatprep.subr.mxu0 0.0
      %85 = vmatpush1.msra.mxu0 0.0
      %86 = vmatprep.subr.mxu0 0.0
      %87 = vmatpush1.msra.mxu0 0.0
      %88 = vmatprep.subr.mxu0 0.0
      %89 = vmatpush1.msra.mxu0 0.0
      %90 = vmatprep.subr.mxu0 0.0
      %91 = vmatpush1.msra.mxu0 0.0
      %92 = vmatprep.subr.mxu0 0.0
      %93 = vmatpush1.msra.mxu0 0.0
      %94 = vmatprep.subr.mxu0 0.0
      %95 = vmatpush1.msra.mxu0 0.0
      %96 = vmatprep.subr.mxu0 0.0
      %97 = vmatpush1.msra.mxu0 0.0
      %98 = vmatprep.subr.mxu0 0.0
      %99 = vmatpush1.msra.mxu0 0.0
      %100 = vmatprep.subr.mxu0 0.0
      %101 = vmatpush1.msra.mxu0 0.0
      %102 = vmatprep.subr.mxu0 0.0
      %103 = vmatpush1.msra.mxu0 0.0
      %104 = vmatprep.subr.mxu0 0.0
      %105 = vmatpush1.msra.mxu0 0.0
      %106 = vmatprep.subr.mxu0 0.0
      %107 = vmatpush1.msra.mxu0 0.0
      %108 = vmatprep.subr.mxu0 0.0
      %109 = vmatpush1.msra.mxu0 0.0
      %110 = vmatprep.subr.mxu0 0.0
      %111 = vmatpush1.msra.mxu0 0.0
      %112 = vmatprep.subr.mxu0 0.0
      %113 = vmatpush1.msra.mxu0 0.0
      %114 = vmatprep.subr.mxu0 0.0
      %115 = vmatpush1.msra.mxu0 0.0
      %116 = vmatprep.subr.mxu0 0.0
      %117 = vmatpush1.msra.mxu0 0.0
      %118 = vmatprep.subr.mxu0 0.0
      %119 = vmatpush1.msra.mxu0 0.0
      %120 = vmatprep.subr.mxu0 0.0
      %121 = vmatpush1.msra.mxu0 0.0
      %122 = vmatprep.subr.mxu0 0.0
      %123 = vmatpush1.msra.mxu0 0.0
      %124 = vmatprep.subr.mxu0 0.0
      %125 = vmatpush1.msra.mxu0 0.0
      %126 = vmatprep.mubr.f32.mxu0 0.0
      %127 = vmatmul.mubr.f32.gmra.mrb[0].mxu0 %v60
      %v128 = vpop.f32.mrb[0].mxu0
      %v129 = vadd.f32 0.0, %v128
      %v130 = vpop.f32.mrb[0].mxu0
      %131 = vdwg.mxu0
      %132 = vst.msk [vmem:[%s2] sm:$0xff] %vm50, %v129
    $region25: #{tpu_custom_call.1} parent=1 // pred_fallthru
      _
    // Predicated region
    $region26: #{tpu_custom_call.1} parent=1 // pred_check
      _
    $region27: #{tpu_custom_call.1} parent=1 // pred_check_branch
      %134 = sbr.rel (0) target = $region29
    $region28: #{tpu_custom_call.1} parent=1 // pred_region
      _
    $region29: #{tpu_custom_call.1} parent=1 // pred_fallthru
      _
    // Predicated region
    $region30: #{tpu_custom_call.1} parent=1 // pred_check
      _
    $region31: #{tpu_custom_call.1} parent=1 // pred_check_branch
      %136 = sbr.rel (0) target = $region33
    $region32: #{tpu_custom_call.1} parent=1 // pred_region
      _
    $region33: #{tpu_custom_call.1} parent=1 // pred_fallthru
      _
    %137 = vsyncpa [#allocation4], 1
    %138 = vsyncpa [#allocation6], 1

</llo_original>
